<compile_context>
chip_gen: v6e
topology: v6e:2x2x1
jax: 0.10.0
libtpu: 0.0.40
codegen_flags: <defaults>
</compile_context>

<pallas_src>
import math

import jax
import jax.numpy as jnp
from jax import lax
from jax.experimental import pallas as pl
from jax.experimental.pallas import tpu as pltpu


def _round_up(x, m):
    return ((x + m - 1) // m) * m


def _choose_tile(dim, preferred, align):
    """Return (tile, padded_dim).

    If the (alignment-padded) dim fits inside `preferred`, use one full-extent tile;
    otherwise use `preferred` (a multiple of `align`) and pad up to a multiple of it.
    """
    aligned = _round_up(dim, align)
    if aligned <= preferred:
        return aligned, aligned
    return preferred, _round_up(dim, preferred)


def _linear_kernel_acc(x_ref, w_ref, b_ref, o_ref, acc_ref):
    # x_ref:   (tm, tk)  VMEM
    # w_ref:   (tn, tk)  VMEM  (PyTorch [out, in] layout tile)
    # b_ref:   (1,  tn)  VMEM
    # o_ref:   (tm, tn)  VMEM
    # acc_ref: (tm, tn)  f32 VMEM scratch, resident across the K axis
    k = pl.program_id(2)

    @pl.when(k == 0)
    def _():
        acc_ref[...] = jnp.zeros_like(acc_ref)

    # Contract over the shared 'in' axis; the MXU handles transposed-RHS natively.
    acc_ref[...] += lax.dot_general(
        x_ref[...], w_ref[...],
        dimension_numbers=(((1,), (1,)), ((), ())),
        preferred_element_type=jnp.float32,
    )

    @pl.when(k == pl.num_programs(2) - 1)
    def _():
        o_ref[...] = (acc_ref[...] + b_ref[...].astype(jnp.float32)).astype(o_ref.dtype)


def _linear_kernel_single_k(x_ref, w_ref, b_ref, o_ref):
    # Whole reduction fits one K tile: no scratch, no epilogue gating.
    acc = lax.dot_general(
        x_ref[...], w_ref[...],
        dimension_numbers=(((1,), (1,)), ((), ())),
        preferred_element_type=jnp.float32,
    )
    o_ref[...] = (acc + b_ref[...].astype(jnp.float32)).astype(o_ref.dtype)


def linear_init_forward(x, weight, bias, *, tile_m=256, tile_n=256, tile_k=512):
    """y = x @ weight.T + bias via a Pallas TPU kernel.

    x:      [..., in_dim]
    weight: [out_dim, in_dim]   (PyTorch nn.Linear layout, used as-is)
    bias:   [out_dim]
    """
    orig_shape = x.shape
    K = orig_shape[-1]
    N, K_w = weight.shape
    assert K == K_w and bias.shape == (N,)

    # Flatten leading dims (PyTorch Linear semantics over the last dim).
    x2 = x.reshape(-1, K)
    M = x2.shape[0]

    # tile_m: multiple of 8 (f32 sublane); tile_n / tile_k: multiples of 128 (lane).
    tm, Mp = _choose_tile(M, tile_m, 8)
    tn, Np = _choose_tile(N, tile_n, 128)
    tk, Kp = _choose_tile(K, tile_k, 128)

    # Zero-pad to tile multiples (JAX glue). Zero K-columns / N-rows contribute nothing
    # to the accumulation; padded output rows/cols are sliced off below.
    if (Mp, Kp) != (M, K):
        x2 = jnp.pad(x2, ((0, Mp - M), (0, Kp - K)))
    if (Np, Kp) != (N, K):
        weight = jnp.pad(weight, ((0, Np - N), (0, Kp - K)))
    if Np != N:
        bias = jnp.pad(bias, (0, Np - N))
    b2 = bias.reshape(1, Np)

    grid = (Mp // tm, Np // tn, Kp // tk)
    single_k = grid[2] == 1

    flops = 2 * Mp * Np * Kp
    bytes_accessed = (x2.size * x2.dtype.itemsize
                      + weight.size * weight.dtype.itemsize
                      + b2.size * b2.dtype.itemsize
                      + Mp * Np * x2.dtype.itemsize)

    kernel = _linear_kernel_single_k if single_k else _linear_kernel_acc
    scratch = [] if single_k else [pltpu.VMEM((tm, tn), jnp.float32)]

    out = pl.pallas_call(
        kernel,
        out_shape=jax.ShapeDtypeStruct((Mp, Np), x.dtype),
        grid_spec=pltpu.PrefetchScalarGridSpec(
            num_scalar_prefetch=0,
            grid=grid,
            in_specs=[
                pl.BlockSpec((tm, tk), lambda i, j, k: (i, k)),   # x
                pl.BlockSpec((tn, tk), lambda i, j, k: (j, k)),   # weight (PyTorch layout)
                pl.BlockSpec((1, tn), lambda i, j, k: (0, j)),    # bias
            ],
            out_specs=pl.BlockSpec((tm, tn), lambda i, j, k: (i, j)),
            scratch_shapes=scratch,
        ),
        compiler_params=pltpu.CompilerParams(
            dimension_semantics=("parallel", "parallel", "arbitrary"),
        ),
        cost_estimate=pl.CostEstimate(
            flops=flops, transcendentals=0, bytes_accessed=bytes_accessed),
    )(x2, weight, b2)

    if (Mp, Np) != (M, N):
        out = out[:M, :N]
    return out.reshape(orig_shape[:-1] + (N,))
    # TODO(synk): for v6e/v7x MXU peak, cast x/weight to bf16 at the wrapper boundary
    # (keeping the f32 accumulator) when the surrounding model's precision allows.


def make_linear_init_params(key, in_dim, out_dim, w_init_gain="linear",
                            dtype=jnp.float32):
    """Matches LinearInit.__init__ semantics:
       - weight: xavier_uniform_ with gain = calculate_gain(w_init_gain)
       - bias:   PyTorch Linear default, U(-1/sqrt(in_dim), 1/sqrt(in_dim))
    """
    gains = {"linear": 1.0, "relu": math.sqrt(2.0), "tanh": 5.0 / 3.0,
             "sigmoid": 1.0}
    gain = gains.get(w_init_gain, 1.0)
    k_w, k_b = jax.random.split(key)
    w_bound = gain * math.sqrt(6.0 / (in_dim + out_dim))
    weight = jax.random.uniform(k_w, (out_dim, in_dim), dtype,
                                minval=-w_bound, maxval=w_bound)
    b_bound = 1.0 / math.sqrt(in_dim)
    bias = jax.random.uniform(k_b, (out_dim,), dtype,
                              minval=-b_bound, maxval=b_bound)
    return weight, bias


if __name__ == "__main__":
    key = jax.random.PRNGKey(0)
    k_x, k_p = jax.random.split(key)

    # Small shapes consistent with the module (single K tile -> fast path).
    batch, in_dim, out_dim = 16, 32, 64
    x = jax.random.normal(k_x, (batch, in_dim), jnp.float32)
    weight, bias = make_linear_init_params(k_p, in_dim, out_dim,
                                           w_init_gain="linear")

    y = linear_init_forward(x, weight, bias)
    jax.block_until_ready(y)

    y_ref = x @ weight.T + bias
    assert y.shape == (batch, out_dim)
    assert jnp.allclose(y, y_ref, atol=1e-5, rtol=1e-5)

    # Second check at larger, tile-exercising shapes (multi-step M/N/K grid,
    # non-divisible batch to exercise padding + the accumulator kernel).
    k_x2, k_p2 = jax.random.split(jax.random.PRNGKey(1))
    M2, K2, N2 = 300, 640, 384
    x2 = jax.random.normal(k_x2, (M2, K2), jnp.float32)
    w2, b2 = make_linear_init_params(k_p2, K2, N2)
    y2 = linear_init_forward(x2, w2, b2)
    jax.block_until_ready(y2)
    y2_ref = x2 @ w2.T + b2
    assert y2.shape == (M2, N2)
    assert jnp.allclose(y2, y2_ref, atol=1e-4, rtol=1e-4)

    # Third check: leading-dims input (PyTorch Linear over last axis).
    x3 = jax.random.normal(jax.random.PRNGKey(2), (2, 7, in_dim), jnp.float32)
    y3 = linear_init_forward(x3, weight, bias)
    jax.block_until_ready(y3)
    y3_ref = x3 @ weight.T + bias
    assert y3.shape == (2, 7, out_dim)
    assert jnp.allclose(y3, y3_ref, atol=1e-5, rtol=1e-5)

    print("KERNEL_OK")
</pallas_src>

<mosaic_0001>
module attributes {stable_mosaic.version = 11 : i64} {
  func.func @_linear_kernel_single_k(%arg0: i32, %arg1: i32, %arg2: i32, %arg3: memref<16x128xf32, #tpu.memory_space<vmem>>, %arg4: memref<128x128xf32, #tpu.memory_space<vmem>>, %arg5: memref<1x128xf32, #tpu.memory_space<vmem>>, %arg6: memref<16x128xf32, #tpu.memory_space<vmem>>) attributes {dimension_semantics = [#tpu.dimension_semantics<parallel>, #tpu.dimension_semantics<parallel>, #tpu.dimension_semantics<arbitrary>], iteration_bounds = array<i64: 1, 1, 1>, scalar_prefetch = 0 : i64, scratch_operands = 0 : i64, tpu.core_type = #tpu.core_type<tc>, window_params = [{transform_indices = @transform_0, window_bounds = array<i64: 16, 128>}, {transform_indices = @transform_1, window_bounds = array<i64: 128, 128>}, {transform_indices = @transform_2, window_bounds = array<i64: 1, 128>}, {transform_indices = @transform_3, window_bounds = array<i64: 16, 128>}]} {
    %c0 = arith.constant 0 : index
    %c0_0 = arith.constant 0 : index
    %0 = vector.load %arg3[%c0, %c0_0] : memref<16x128xf32, #tpu.memory_space<vmem>>, vector<16x128xf32>
    %c0_1 = arith.constant 0 : index
    %c0_2 = arith.constant 0 : index
    %1 = vector.load %arg4[%c0_1, %c0_2] : memref<128x128xf32, #tpu.memory_space<vmem>>, vector<128x128xf32>
    %cst = arith.constant dense<0.000000e+00> : vector<16x128xf32>
    %2 = tpu.matmul %0, %1, %cst {dimension_numbers = #tpu.dot_dimension_numbers<[1], [1], [0], [0], [0, 0, 1, 0], [], []>} : vector<16x128xf32>, vector<128x128xf32>, vector<16x128xf32> -> vector<16x128xf32>
    %c0_3 = arith.constant 0 : index
    %c0_4 = arith.constant 0 : index
    %3 = vector.load %arg5[%c0_3, %c0_4] : memref<1x128xf32, #tpu.memory_space<vmem>>, vector<1x128xf32>
    %4 = vector.broadcast %3 : vector<1x128xf32> to vector<16x128xf32>
    %5 = arith.addf %2, %4 : vector<16x128xf32>
    %c0_5 = arith.constant 0 : index
    %c0_6 = arith.constant 0 : index
    %6 = vector.load %arg6[%c0_5, %c0_6] : memref<16x128xf32, #tpu.memory_space<vmem>>, vector<16x128xf32>
    tpu.vector_store %arg6[%c0_5, %c0_6], %5 {strides = array<i32>} : memref<16x128xf32, #tpu.memory_space<vmem>>, vector<16x128xf32>,
    return
  }
  func.func @transform_0(%arg0: i32, %arg1: i32, %arg2: i32) -> (i32, i32) {
    %c0_i32 = arith.constant 0 : i32
    return %arg0, %arg2 : i32, i32
  }
  func.func @transform_1(%arg0: i32, %arg1: i32, %arg2: i32) -> (i32, i32) {
    %c0_i32 = arith.constant 0 : i32
    return %arg1, %arg2 : i32, i32
  }
  func.func @transform_2(%arg0: i32, %arg1: i32, %arg2: i32) -> (i32, i32) {
    %c0_i32 = arith.constant 0 : i32
    %c0_i32_0 = arith.constant 0 : i32
    return %c0_i32, %arg1 : i32, i32
  }
  func.func @transform_3(%arg0: i32, %arg1: i32, %arg2: i32) -> (i32, i32) {
    %c0_i32 = arith.constant 0 : i32
    return %arg0, %arg1 : i32, i32
  }
}

</mosaic_0001>

<llo_original>
// kernel: tpu_custom_call.1
$region0: #{tpu_custom_call.1}
  #allocation0 [shape = 'u32[]', space=smem, size = 0x4, offset = 0x4, fixed_abs, tag = 'smem constant byte address 0x4 - core index']
  #allocation1 [shape = 'u32[144,128]{1,0:T(1,128)}', space=vmem, size = 0x12000, scoped, tag = 'internal scratch']
  %s0 = inlined_call_operand.hbm [shape: f32[16,128], index: 0, kind: input, shape index: {}]
  %s1 = inlined_call_operand.hbm [shape: f32[128,128], index: 1, kind: input, shape index: {}]
  %s2 = inlined_call_operand.vmem [shape: f32[1,128], index: 2, kind: input, shape index: {}]
  %s3 = inlined_call_operand.hbm [shape: f32[16,128], index: 3, kind: output, shape index: {}]
  %s4 = sld [smem:[#allocation0]]
  $region30: #{tpu_custom_call.1} parent=0
    _
  %s6 = ssub.s32 1, %s4
  %s7 = scalar_select 0, %s6, %s4
  $region1: #{tpu_custom_call.1} parent=0
    #allocation2 [shape = 'u8[8192]{0}', space=vmem, size = 0x2000, scoped, tag = 'input window, operand 0, single buffered']
    #allocation3 [shape = 's32[1]{0}', space=sflag, size = 0x4, scoped, tag = 'scoped memory for tpu_custom_call.1']
    #allocation4 [shape = 's32[1]{0}', space=sflag, size = 0x4, scoped, tag = 'scoped memory for tpu_custom_call.1']
    #allocation5 [shape = 'u8[65536]{0}', space=vmem, size = 0x10000, scoped, tag = 'input window, operand 1, single buffered']
    #allocation6 [shape = 's32[1]{0}', space=sflag, size = 0x4, scoped, tag = 'scoped memory for tpu_custom_call.1']
    #allocation7 [shape = 'u8[8192]{0}', space=vmem, size = 0x2000, scoped, tag = 'output window, operand 0, single buffered']
    %8 = vsyncpa [#allocation3], 0
    %9 = vsyncpa [#allocation6], 0
    %10 = vsyncpa [#allocation4], 0
    // Predicated region
    $region2: #{tpu_custom_call.1} parent=1 // pred_check
      _
    $region3: #{tpu_custom_call.1} parent=1 // pred_check_branch
      %12 = sbr.rel (0) target = $region5
    $region4: #{tpu_custom_call.1} parent=1 // pred_region
      %s14 = ssub.s32 256, 256
      %15 = vsyncadd [#allocation3], %s14
      %s16 = sshll.u32 [#allocation2], 4
      %s17 = int_to_ptr.vmem [resolvable:$true] %s16
      %22 = dma.hbm_to_vmem [thread:$0]  %s0, 256, %s17, [#allocation3], 128, 128, 8
    $region5: #{tpu_custom_call.1} parent=1 // pred_fallthru
      _
    // Predicated region
    $region6: #{tpu_custom_call.1} parent=1 // pred_check
      _
    $region7: #{tpu_custom_call.1} parent=1 // pred_check_branch
      %24 = sbr.rel (0) target = $region9
    $region8: #{tpu_custom_call.1} parent=1 // pred_region
      %s26 = ssub.s32 2048, 2048
      %27 = vsyncadd [#allocation6], %s26
      %s28 = sshll.u32 [#allocation5], 4
      %s29 = int_to_ptr.vmem [resolvable:$true] %s28
      %34 = dma.hbm_to_vmem [thread:$0]  %s1, 2048, %s29, [#allocation6], 128, 128, 8
    $region9: #{tpu_custom_call.1} parent=1 // pred_fallthru
      _
    // Predicated region
    $region10: #{tpu_custom_call.1} parent=1 // pred_check
      _
    $region11: #{tpu_custom_call.1} parent=1 // pred_check_branch
      %36 = sbr.rel (0) target = $region13
    $region12: #{tpu_custom_call.1} parent=1 // pred_region
      _
    $region13: #{tpu_custom_call.1} parent=1 // pred_fallthru
      _
    // Predicated region
    $region14: #{tpu_custom_call.1} parent=1 // pred_check
      _
    $region15: #{tpu_custom_call.1} parent=1 // pred_check_branch
      %38 = sbr.rel (0) target = $region17
    $region16: #{tpu_custom_call.1} parent=1 // pred_region
      %39 = dma.done [#allocation3], 256
    $region17: #{tpu_custom_call.1} parent=1 // pred_fallthru
      _
    // Predicated region
    $region18: #{tpu_custom_call.1} parent=1 // pred_check
      _
    $region19: #{tpu_custom_call.1} parent=1 // pred_check_branch
      %41 = sbr.rel (0) target = $region21
    $region20: #{tpu_custom_call.1} parent=1 // pred_region
      %42 = dma.done [#allocation6], 2048
    $region21: #{tpu_custom_call.1} parent=1 // pred_fallthru
      _
    %v43 = vld [vmem:[#allocation2] sm:$0xff]
    %v44 = vld [vmem:[#allocation2 + $0x8] sm:$0xff]
    %v45 = vld [vmem:[#allocation5] sm:$0xff]
    %v46 = vld [vmem:[#allocation5 + $0x8] sm:$0xff]
    %v47 = vld [vmem:[#allocation5 + $0x10] sm:$0xff]
    %v48 = vld [vmem:[#allocation5 + $0x18] sm:$0xff]
    %v49 = vld [vmem:[#allocation5 + $0x20] sm:$0xff]
    %v50 = vld [vmem:[#allocation5 + $0x28] sm:$0xff]
    %v51 = vld [vmem:[#allocation5 + $0x30] sm:$0xff]
    %v52 = vld [vmem:[#allocation5 + $0x38] sm:$0xff]
    %v53 = vld [vmem:[#allocation5 + $0x40] sm:$0xff]
    %v54 = vld [vmem:[#allocation5 + $0x48] sm:$0xff]
    %v55 = vld [vmem:[#allocation5 + $0x50] sm:$0xff]
    %v56 = vld [vmem:[#allocation5 + $0x58] sm:$0xff]
    %v57 = vld [vmem:[#allocation5 + $0x60] sm:$0xff]
    %v58 = vld [vmem:[#allocation5 + $0x68] sm:$0xff]
    %v59 = vld [vmem:[#allocation5 + $0x70] sm:$0xff]
    %v60 = vld [vmem:[#allocation5 + $0x78] sm:$0xff]
    %v61 = vld [vmem:[%s2] sm:$0x1]
    %v63 = vlaneseq
    %v64 = vshrl.u32 %v63, 7
    %v65 = vsub.s32 0, %v64
    %v66 = vrot.slane %v61, %v65
    %68 = vmatprep.subr.mxu0 0.0
    %69 = vmatpush1.xpose.msra.mxu0 %v60
    %70 = vmatprep.subr.mxu0 0.0
    %71 = vmatpush1.xpose.msra.mxu0 %v59
    %72 = vmatprep.subr.mxu0 0.0
    %73 = vmatpush1.xpose.msra.mxu0 %v58
    %74 = vmatprep.subr.mxu0 0.0
    %75 = vmatpush1.xpose.msra.mxu0 %v57
    %76 = vmatprep.subr.mxu0 0.0
    %77 = vmatpush1.xpose.msra.mxu0 %v56
    %78 = vmatprep.subr.mxu0 0.0
    %79 = vmatpush1.xpose.msra.mxu0 %v55
    %80 = vmatprep.subr.mxu0 0.0
    %81 = vmatpush1.xpose.msra.mxu0 %v54
    %82 = vmatprep.subr.mxu0 0.0
    %83 = vmatpush1.xpose.msra.mxu0 %v53
    %84 = vmatprep.subr.mxu0 0.0
    %85 = vmatpush1.xpose.msra.mxu0 %v52
    %86 = vmatprep.subr.mxu0 0.0
    %87 = vmatpush1.xpose.msra.mxu0 %v51
    %88 = vmatprep.subr.mxu0 0.0
    %89 = vmatpush1.xpose.msra.mxu0 %v50
    %90 = vmatprep.subr.mxu0 0.0
    %91 = vmatpush1.xpose.msra.mxu0 %v49
    %92 = vmatprep.subr.mxu0 0.0
    %93 = vmatpush1.xpose.msra.mxu0 %v48
    %94 = vmatprep.subr.mxu0 0.0
    %95 = vmatpush1.xpose.msra.mxu0 %v47
    %96 = vmatprep.subr.mxu0 0.0
    %97 = vmatpush1.xpose.msra.mxu0 %v46
    %98 = vmatprep.subr.mxu0 0.0
    %99 = vmatpush1.xpose.msra.mxu0 %v45
    %100 = vmatprep.subr.mxu0 0.0
    %101 = vmatpush2.xpose.msra.mxu0 0.0
    %102 = vmatprep.subr.mxu0 0.0
    %103 = vmatpush2.xpose.msra.mxu0 0.0
    %104 = vmatprep.subr.mxu0 0.0
    %105 = vmatpush2.xpose.msra.mxu0 0.0
    %106 = vmatprep.subr.mxu0 0.0
    %107 = vmatpush2.xpose.msra.mxu0 0.0
    %108 = vmatprep.subr.mxu0 0.0
    %109 = vmatpush2.xpose.msra.mxu0 0.0
    %110 = vmatprep.subr.mxu0 0.0
    %111 = vmatpush2.xpose.msra.mxu0 0.0
    %112 = vmatprep.subr.mxu0 0.0
    %113 = vmatpush2.xpose.msra.mxu0 0.0
    %114 = vmatprep.subr.mxu0 0.0
    %115 = vmatpush2.xpose.msra.mxu0 0.0
    %116 = vmatprep.subr.mxu0 0.0
    %117 = vmatpush2.xpose.msra.mxu0 0.0
    %118 = vmatprep.subr.mxu0 0.0
    %119 = vmatpush2.xpose.msra.mxu0 0.0
    %120 = vmatprep.subr.mxu0 0.0
    %121 = vmatpush2.xpose.msra.mxu0 0.0
    %122 = vmatprep.subr.mxu0 0.0
    %123 = vmatpush2.xpose.msra.mxu0 0.0
    %124 = vmatprep.subr.mxu0 0.0
    %125 = vmatpush2.xpose.msra.mxu0 0.0
    %126 = vmatprep.subr.mxu0 0.0
    %127 = vmatpush2.xpose.msra.mxu0 0.0
    %128 = vmatprep.subr.mxu0 0.0
    %129 = vmatpush2.xpose.msra.mxu0 0.0
    %130 = vmatprep.subr.mxu0 0.0
    %131 = vmatpush2.xpose.msra.mxu0 0.0
    %132 = vmatprep.mubr.f32.mxu0 0.0
    %133 = vmatmul.mubr.f32.gmra.mxu0 %v43
    %v134 = vpop.f32.mrf.mxu0
    %v135 = vadd.f32 %v66, %v134
    %v136 = vpop.f32.mrf.mxu0
    %137 = vmatprep.mubr.f32.mxu0 0.0
    %138 = vmatmul.mubr.f32.gmra.mxu0 %v44
    %v139 = vpop.f32.mrf.mxu0
    %v140 = vadd.f32 %v66, %v139
    %v141 = vpop.f32.mrf.mxu0
    %142 = vdwg.mxu0
    %143 = vst [vmem:[#allocation7] sm:$0xff] %v135
    %144 = vst [vmem:[#allocation7 + $0x8] sm:$0xff] %v140
    // Predicated region
    $region22: #{tpu_custom_call.1} parent=1 // pred_check
      _
    $region23: #{tpu_custom_call.1} parent=1 // pred_check_branch
      %146 = sbr.rel (0) target = $region25
    $region24: #{tpu_custom_call.1} parent=1 // pred_region
      %s148 = ssub.s32 256, 256
      %149 = vsyncadd [#allocation4], %s148
      %s150 = sshll.u32 [#allocation7], 4
      %s151 = int_to_ptr.vmem [resolvable:$true] %s150
      %156 = dma.vmem_to_hbm [thread:$0]  %s151, 256, %s3, [#allocation4], 128, 128, 8
    $region25: #{tpu_custom_call.1} parent=1 // pred_fallthru
      _
    // Predicated region
    $region26: #{tpu_custom_call.1} parent=1 // pred_check
      _
    $region27: #{tpu_custom_call.1} parent=1 // pred_check_branch
      %158 = sbr.rel (0) target = $region29
    $region28: #{tpu_custom_call.1} parent=1 // pred_region
      %159 = dma.done [#allocation4], 256
    $region29: #{tpu_custom_call.1} parent=1 // pred_fallthru
      _
    %160 = vsyncpa [#allocation3], 1
    %161 = vsyncpa [#allocation6], 1
    %162 = vsyncpa [#allocation4], 1

</llo_original>
